<compile_context>
chip_gen: v7x
topology: tpu7x:2x2x1
jax: 0.10.0
libtpu: 0.0.40
codegen_flags: <defaults>
</compile_context>

<pallas_src>
import jax
import jax.numpy as jnp
from jax.experimental import pallas as pl
from jax.experimental.pallas import tpu as pltpu

_OUT = 28 * 28          # 784 — written directly (full-array-dim block width)
_H1 = 128
_H2 = 128
_NCLS = 10


def _round_up(n, m):
    return ((n + m - 1) // m) * m


def _generator_kernel(xc_ref, wc_ref, bc_ref, w2_ref, b2_ref, w3_ref, b3_ref,
                      out_ref):
    wdt = w2_ref.dtype  # f32 by default; bf16 when use_bf16=True

    # Fused fc1 / fc1_labels: relu(Xcat @ Wcat + bcat) == [h1 | hl]
    h = jnp.dot(xc_ref[...], wc_ref[...],
                preferred_element_type=jnp.float32) + bc_ref[...]
    h = jnp.maximum(h, 0.0)

    # fc2 on the (already-concatenated) 256-wide hidden state.
    h2 = jnp.dot(h.astype(wdt), w2_ref[...],
                 preferred_element_type=jnp.float32) + b2_ref[...]
    h2 = jnp.maximum(h2, 0.0)

    # fc3 (784-wide, lane-exact block) -> tanh
    o = jnp.dot(h2.astype(wdt), w3_ref[...],
                preferred_element_type=jnp.float32) + b3_ref[...]
    out_ref[...] = jnp.tanh(o)


def generator_forward(x, labels, params, *, block_batch=512, use_bf16=False):
    """x: (B, z) float32, labels: (B, 10) (any numeric dtype).

    Returns (B, 1, 28, 28) float32, matching the PyTorch Generator.forward.
    """
    B, Z = x.shape
    (w1, b1), (wl, bl), (w2, b2), (w3, b3) = params

    labels_f = labels.astype(jnp.float32)

    # ---- fc1 fusion: block-diagonal weight, concatenated input ------------
    K = Z + _NCLS
    Kp = _round_up(K, 8)                      # align K to sublane multiple
    wcat = jnp.zeros((Kp, 2 * _H1), jnp.float32)
    wcat = wcat.at[:Z, :_H1].set(w1)
    wcat = wcat.at[Z:K, _H1:].set(wl)
    bcat = jnp.concatenate([b1, bl], axis=1)  # (1, 256)

    xcat = jnp.concatenate([x, labels_f], axis=1)       # (B, Z+10)
    if Kp != K:
        xcat = jnp.pad(xcat, ((0, 0), (0, Kp - K)))

    # ---- batch tiling ------------------------------------------------------
    # Split into >=2 tiles when possible so dimension_semantics=("parallel",)
    # can use both TensorCores on v7x; shrink (8-aligned) for tiny batches.
    if B >= 16:
        tb = min(block_batch, _round_up(-(-B // 2), 8))
    else:
        tb = _round_up(B, 8)
    Bp = _round_up(B, tb)
    if Bp != B:
        xcat = jnp.pad(xcat, ((0, Bp - B), (0, 0)))

    if use_bf16:
        xcat = xcat.astype(jnp.bfloat16)
        wcat = wcat.astype(jnp.bfloat16)
        w2 = w2.astype(jnp.bfloat16)
        w3 = w3.astype(jnp.bfloat16)

    grid = (Bp // tb,)
    batch_map = lambda i: (i, 0)   # blocked over batch
    const_map = lambda i: (0, 0)   # weights resident across the whole grid

    in_specs = [
        pl.BlockSpec((tb, Kp), batch_map),       # Xcat tile
        pl.BlockSpec(wcat.shape, const_map),
        pl.BlockSpec(bcat.shape, const_map),
        pl.BlockSpec(w2.shape, const_map),
        pl.BlockSpec(b2.shape, const_map),
        pl.BlockSpec(w3.shape, const_map),
        pl.BlockSpec(b3.shape, const_map),
    ]
    out_spec = pl.BlockSpec((tb, _OUT), batch_map)

    out = pl.pallas_call(
        _generator_kernel,
        out_shape=jax.ShapeDtypeStruct((Bp, _OUT), jnp.float32),
        grid=grid,
        in_specs=in_specs,
        out_specs=out_spec,
        compiler_params=pltpu.CompilerParams(
            dimension_semantics=("parallel",)),
    )(xcat, wcat, bcat, w2, b2, w3, b3)

    if Bp != B:
        out = out[:B]
    return out.reshape((B, 1, 28, 28))


def init_params(key, z_dim):
    """PyTorch-style init: U(-1/sqrt(fan_in), 1/sqrt(fan_in)).

    Weights stored pre-transposed as (in, out); biases as (1, out)."""
    def linear(key, fan_in, fan_out):
        kw, kb = jax.random.split(key)
        bound = 1.0 / jnp.sqrt(fan_in)
        w = jax.random.uniform(kw, (fan_in, fan_out), jnp.float32, -bound, bound)
        b = jax.random.uniform(kb, (1, fan_out), jnp.float32, -bound, bound)
        return w, b

    k1, k2, k3, k4 = jax.random.split(key, 4)
    fc1 = linear(k1, z_dim, _H1)
    fc1_labels = linear(k2, _NCLS, _H1)
    fc2 = linear(k3, 2 * _H1, _H2)
    fc3 = linear(k4, _H2, _OUT)
    return fc1, fc1_labels, fc2, fc3


def _reference_forward(x, labels, params):
    (w1, b1), (wl, bl), (w2, b2), (w3, b3) = params
    h1 = jax.nn.relu(x @ w1 + b1)
    hl = jax.nn.relu(labels.astype(jnp.float32) @ wl + bl)
    h = jnp.concatenate([h1, hl], axis=1)
    h2 = jax.nn.relu(h @ w2 + b2)
    o = jnp.tanh(h2 @ w3 + b3)
    return o.reshape((x.shape[0], 1, 28, 28))


if __name__ == "__main__":
    key = jax.random.PRNGKey(0)
    kp, kx, kl = jax.random.split(key, 3)

    B, Z = 8, 32
    params = init_params(kp, Z)

    x = jax.random.normal(kx, (B, Z), jnp.float32)
    label_ids = jax.random.randint(kl, (B,), 0, 10)
    labels = jax.nn.one_hot(label_ids, 10, dtype=jnp.int32)   # (B, 10) int one-hot

    out = generator_forward(x, labels, params)
    out = jax.block_until_ready(out)

    ref = _reference_forward(x, labels, params)
    assert out.shape == (B, 1, 28, 28)
    assert jnp.allclose(out, ref, atol=1e-5, rtol=1e-5)

    print("KERNEL_OK")
</pallas_src>

<mosaic_0001>
module attributes {stable_mosaic.version = 11 : i64} {
  func.func @_generator_kernel(%arg0: i32, %arg1: memref<8x48xf32, #tpu.memory_space<vmem>>, %arg2: memref<48x256xf32, #tpu.memory_space<vmem>>, %arg3: memref<1x256xf32, #tpu.memory_space<vmem>>, %arg4: memref<256x128xf32, #tpu.memory_space<vmem>>, %arg5: memref<1x128xf32, #tpu.memory_space<vmem>>, %arg6: memref<128x784xf32, #tpu.memory_space<vmem>>, %arg7: memref<1x784xf32, #tpu.memory_space<vmem>>, %arg8: memref<8x784xf32, #tpu.memory_space<vmem>>) attributes {dimension_semantics = [#tpu.dimension_semantics<parallel>], iteration_bounds = array<i64: 1>, scalar_prefetch = 0 : i64, scratch_operands = 0 : i64, tpu.core_type = #tpu.core_type<tc>, window_params = [{transform_indices = @transform_0, window_bounds = array<i64: 8, 48>}, {pipeline_mode = #tpu.pipeline_mode<synchronous>, transform_indices = @transform_1, window_bounds = array<i64: 48, 256>}, {pipeline_mode = #tpu.pipeline_mode<synchronous>, transform_indices = @transform_2, window_bounds = array<i64: 1, 256>}, {pipeline_mode = #tpu.pipeline_mode<synchronous>, transform_indices = @transform_3, window_bounds = array<i64: 256, 128>}, {pipeline_mode = #tpu.pipeline_mode<synchronous>, transform_indices = @transform_4, window_bounds = array<i64: 1, 128>}, {pipeline_mode = #tpu.pipeline_mode<synchronous>, transform_indices = @transform_5, window_bounds = array<i64: 128, 784>}, {pipeline_mode = #tpu.pipeline_mode<synchronous>, transform_indices = @transform_6, window_bounds = array<i64: 1, 784>}, {transform_indices = @transform_7, window_bounds = array<i64: 8, 784>}]} {
    %c0 = arith.constant 0 : index
    %c0_0 = arith.constant 0 : index
    %0 = vector.load %arg1[%c0, %c0_0] : memref<8x48xf32, #tpu.memory_space<vmem>>, vector<8x48xf32>
    %c0_1 = arith.constant 0 : index
    %c0_2 = arith.constant 0 : index
    %1 = vector.load %arg2[%c0_1, %c0_2] : memref<48x256xf32, #tpu.memory_space<vmem>>, vector<48x256xf32>
    %cst = arith.constant dense<0.000000e+00> : vector<8x256xf32>
    %2 = tpu.matmul %0, %1, %cst {dimension_numbers = #tpu.dot_dimension_numbers<[1], [0], [0], [1], [0, 0, 1, 1], [], []>} : vector<8x48xf32>, vector<48x256xf32>, vector<8x256xf32> -> vector<8x256xf32>
    %c0_3 = arith.constant 0 : index
    %c0_4 = arith.constant 0 : index
    %3 = vector.load %arg3[%c0_3, %c0_4] : memref<1x256xf32, #tpu.memory_space<vmem>>, vector<1x256xf32>
    %4 = vector.broadcast %3 : vector<1x256xf32> to vector<8x256xf32>
    %5 = arith.addf %2, %4 : vector<8x256xf32>
    %cst_5 = arith.constant 0.000000e+00 : f32
    %6 = vector.broadcast %cst_5 : f32 to vector<8x256xf32>
    %7 = arith.maximumf %5, %6 : vector<8x256xf32>
    %c0_6 = arith.constant 0 : index
    %c0_7 = arith.constant 0 : index
    %8 = vector.load %arg4[%c0_6, %c0_7] : memref<256x128xf32, #tpu.memory_space<vmem>>, vector<256x128xf32>
    %cst_8 = arith.constant dense<0.000000e+00> : vector<8x128xf32>
    %9 = tpu.matmul %7, %8, %cst_8 {dimension_numbers = #tpu.dot_dimension_numbers<[1], [0], [0], [1], [0, 0, 1, 1], [], []>} : vector<8x256xf32>, vector<256x128xf32>, vector<8x128xf32> -> vector<8x128xf32>
    %c0_9 = arith.constant 0 : index
    %c0_10 = arith.constant 0 : index
    %10 = vector.load %arg5[%c0_9, %c0_10] : memref<1x128xf32, #tpu.memory_space<vmem>>, vector<1x128xf32>
    %11 = vector.broadcast %10 : vector<1x128xf32> to vector<8x128xf32>
    %12 = arith.addf %9, %11 : vector<8x128xf32>
    %cst_11 = arith.constant 0.000000e+00 : f32
    %13 = vector.broadcast %cst_11 : f32 to vector<8x128xf32>
    %14 = arith.maximumf %12, %13 : vector<8x128xf32>
    %c0_12 = arith.constant 0 : index
    %c0_13 = arith.constant 0 : index
    %15 = vector.load %arg6[%c0_12, %c0_13] : memref<128x784xf32, #tpu.memory_space<vmem>>, vector<128x784xf32>
    %cst_14 = arith.constant dense<0.000000e+00> : vector<8x784xf32>
    %16 = tpu.matmul %14, %15, %cst_14 {dimension_numbers = #tpu.dot_dimension_numbers<[1], [0], [0], [1], [0, 0, 1, 1], [], []>} : vector<8x128xf32>, vector<128x784xf32>, vector<8x784xf32> -> vector<8x784xf32>
    %c0_15 = arith.constant 0 : index
    %c0_16 = arith.constant 0 : index
    %17 = vector.load %arg7[%c0_15, %c0_16] : memref<1x784xf32, #tpu.memory_space<vmem>>, vector<1x784xf32>
    %18 = vector.broadcast %17 : vector<1x784xf32> to vector<8x784xf32>
    %19 = arith.addf %16, %18 : vector<8x784xf32>
    %20 = math.tanh %19 : vector<8x784xf32>
    %c0_17 = arith.constant 0 : index
    %c0_18 = arith.constant 0 : index
    %21 = vector.load %arg8[%c0_17, %c0_18] : memref<8x784xf32, #tpu.memory_space<vmem>>, vector<8x784xf32>
    tpu.vector_store %arg8[%c0_17, %c0_18], %20 {strides = array<i32>} : memref<8x784xf32, #tpu.memory_space<vmem>>, vector<8x784xf32>,
    return
  }
  func.func @transform_0(%arg0: i32) -> (i32, i32) {
    %c0_i32 = arith.constant 0 : i32
    %c0_i32_0 = arith.constant 0 : i32
    return %arg0, %c0_i32 : i32, i32
  }
  func.func @transform_1(%arg0: i32) -> (i32, i32) {
    %c0_i32 = arith.constant 0 : i32
    %c0_i32_0 = arith.constant 0 : i32
    %c0_i32_1 = arith.constant 0 : i32
    return %c0_i32, %c0_i32_0 : i32, i32
  }
  func.func @transform_2(%arg0: i32) -> (i32, i32) {
    %c0_i32 = arith.constant 0 : i32
    %c0_i32_0 = arith.constant 0 : i32
    %c0_i32_1 = arith.constant 0 : i32
    return %c0_i32, %c0_i32_0 : i32, i32
  }
  func.func @transform_3(%arg0: i32) -> (i32, i32) {
    %c0_i32 = arith.constant 0 : i32
    %c0_i32_0 = arith.constant 0 : i32
    %c0_i32_1 = arith.constant 0 : i32
    return %c0_i32, %c0_i32_0 : i32, i32
  }
  func.func @transform_4(%arg0: i32) -> (i32, i32) {
    %c0_i32 = arith.constant 0 : i32
    %c0_i32_0 = arith.constant 0 : i32
    %c0_i32_1 = arith.constant 0 : i32
    return %c0_i32, %c0_i32_0 : i32, i32
  }
  func.func @transform_5(%arg0: i32) -> (i32, i32) {
    %c0_i32 = arith.constant 0 : i32
    %c0_i32_0 = arith.constant 0 : i32
    %c0_i32_1 = arith.constant 0 : i32
    return %c0_i32, %c0_i32_0 : i32, i32
  }
  func.func @transform_6(%arg0: i32) -> (i32, i32) {
    %c0_i32 = arith.constant 0 : i32
    %c0_i32_0 = arith.constant 0 : i32
    %c0_i32_1 = arith.constant 0 : i32
    return %c0_i32, %c0_i32_0 : i32, i32
  }
  func.func @transform_7(%arg0: i32) -> (i32, i32) {
    %c0_i32 = arith.constant 0 : i32
    %c0_i32_0 = arith.constant 0 : i32
    return %arg0, %c0_i32 : i32, i32
  }
}

</mosaic_0001>

<llo_original>
// kernel: tpu_custom_call.1
$region0: #{tpu_custom_call.1}
  #allocation0 [shape = 'u32[]', space=smem, size = 0x4, offset = 0x4, fixed_abs, tag = 'smem constant byte address 0x4 - core index']
  #allocation1 [shape = 'u32[144,128]{1,0:T(1,128)}', space=vmem, size = 0x12000, scoped, tag = 'internal scratch']
  %s0 = inlined_call_operand.vmem [shape: f32[8,48], index: 0, kind: input, shape index: {}]
  %s1 = inlined_call_operand.vmem [shape: f32[48,256], index: 1, kind: input, shape index: {}]
  %s2 = inlined_call_operand.vmem [shape: f32[1,256], index: 2, kind: input, shape index: {}]
  %s3 = inlined_call_operand.vmem [shape: f32[256,128], index: 3, kind: input, shape index: {}]
  %s4 = inlined_call_operand.vmem [shape: f32[1,128], index: 4, kind: input, shape index: {}]
  %s5 = inlined_call_operand.vmem [shape: f32[128,784], index: 5, kind: input, shape index: {}]
  %s6 = inlined_call_operand.vmem [shape: f32[1,784], index: 6, kind: input, shape index: {}]
  %s7 = inlined_call_operand.hbm [shape: f32[8,784], index: 7, kind: output, shape index: {}]
  %s8 = sld [smem:[#allocation0]]
  $region38: #{tpu_custom_call.1} parent=0
    _
  %s10 = ssub.s32 1, %s8
  %s11 = scalar_select 0, %s10, %s8
  $region1: #{tpu_custom_call.1} parent=0
    #allocation2 [shape = 'u8[28672]{0}', space=vmem, size = 0x7000, scoped, tag = 'output window, operand 0, single buffered']
    #allocation3 [shape = 's32[1]{0}', space=sflag, size = 0x4, scoped, tag = 'scoped memory for tpu_custom_call.1']
    %12 = vsyncpa [#allocation3], 0
    // Predicated region
    $region2: #{tpu_custom_call.1} parent=1 // pred_check
      _
    $region3: #{tpu_custom_call.1} parent=1 // pred_check_branch
      %14 = sbr.rel (0) target = $region5
    $region4: #{tpu_custom_call.1} parent=1 // pred_region
      _
    $region5: #{tpu_custom_call.1} parent=1 // pred_fallthru
      _
    // Predicated region
    $region6: #{tpu_custom_call.1} parent=1 // pred_check
      _
    $region7: #{tpu_custom_call.1} parent=1 // pred_check_branch
      %16 = sbr.rel (0) target = $region9
    $region8: #{tpu_custom_call.1} parent=1 // pred_region
      _
    $region9: #{tpu_custom_call.1} parent=1 // pred_fallthru
      _
    // Predicated region
    $region10: #{tpu_custom_call.1} parent=1 // pred_check
      _
    $region11: #{tpu_custom_call.1} parent=1 // pred_check_branch
      %18 = sbr.rel (0) target = $region13
    $region12: #{tpu_custom_call.1} parent=1 // pred_region
      _
    $region13: #{tpu_custom_call.1} parent=1 // pred_fallthru
      _
    // Predicated region
    $region14: #{tpu_custom_call.1} parent=1 // pred_check
      _
    $region15: #{tpu_custom_call.1} parent=1 // pred_check_branch
      %20 = sbr.rel (0) target = $region17
    $region16: #{tpu_custom_call.1} parent=1 // pred_region
      _
    $region17: #{tpu_custom_call.1} parent=1 // pred_fallthru
      _
    // Predicated region
    $region18: #{tpu_custom_call.1} parent=1 // pred_check
      _
    $region19: #{tpu_custom_call.1} parent=1 // pred_check_branch
      %22 = sbr.rel (0) target = $region21
    $region20: #{tpu_custom_call.1} parent=1 // pred_region
      _
    $region21: #{tpu_custom_call.1} parent=1 // pred_fallthru
      _
    // Predicated region
    $region22: #{tpu_custom_call.1} parent=1 // pred_check
      _
    $region23: #{tpu_custom_call.1} parent=1 // pred_check_branch
      %24 = sbr.rel (0) target = $region25
    $region24: #{tpu_custom_call.1} parent=1 // pred_region
      _
    $region25: #{tpu_custom_call.1} parent=1 // pred_fallthru
      _
    // Predicated region
    $region26: #{tpu_custom_call.1} parent=1 // pred_check
      _
    $region27: #{tpu_custom_call.1} parent=1 // pred_check_branch
      %26 = sbr.rel (0) target = $region29
    $region28: #{tpu_custom_call.1} parent=1 // pred_region
      _
    $region29: #{tpu_custom_call.1} parent=1 // pred_fallthru
      _
    %v27 = vld [vmem:[%s0] sm:$0xff]
    %v28 = vld [vmem:[%s1] sm:$0xff]
    %v29 = vld [vmem:[%s1 + $0x8] sm:$0xff]
    %v30 = vld [vmem:[%s1 + $0x10] sm:$0xff]
    %v31 = vld [vmem:[%s1 + $0x18] sm:$0xff]
    %v32 = vld [vmem:[%s1 + $0x20] sm:$0xff]
    %v33 = vld [vmem:[%s1 + $0x28] sm:$0xff]
    %v34 = vld [vmem:[%s1 + $0x30] sm:$0xff]
    %v35 = vld [vmem:[%s1 + $0x38] sm:$0xff]
    %v36 = vld [vmem:[%s1 + $0x40] sm:$0xff]
    %v37 = vld [vmem:[%s1 + $0x48] sm:$0xff]
    %v38 = vld [vmem:[%s1 + $0x50] sm:$0xff]
    %v39 = vld [vmem:[%s1 + $0x58] sm:$0xff]
    %v40 = vld [vmem:[%s2] sm:$0x3]
    %v42 = vlaneseq
    %v43 = vshrl.u32 %v42, 7
    %v44 = vsub.s32 0, %v43
    %v45 = vrot.slane %v40, %v44
    %v46 = vlaneseq
    %v47 = vshrl.u32 %v46, 7
    %v48 = vsub.s32 1, %v47
    %v49 = vrot.slane %v40, %v48
    %vm52 = vcmask 392192
    %v54 = vsel %vm52, %v27, 0
    %56 = vmatprep.subr.mxu0 %v29
    %57 = vmatpush1.msra.mxu0 %v28
    %58 = vmatprep.subr.mxu0 %v31
    %59 = vmatpush1.msra.mxu0 %v30
    %60 = vmatprep.subr.mxu0 %v33
    %61 = vmatpush1.msra.mxu0 %v32
    %62 = vmatprep.subr.mxu0 %v35
    %63 = vmatpush1.msra.mxu0 %v34
    %64 = vmatprep.subr.mxu0 %v37
    %65 = vmatpush1.msra.mxu0 %v36
    %66 = vmatprep.subr.mxu0 %v39
    %67 = vmatpush1.msra.mxu0 %v38
    %68 = vmatprep.subr.mxu0 0.0
    %69 = vmatpush1.msra.mxu0 0.0
    %70 = vmatprep.subr.mxu0 0.0
    %71 = vmatpush1.msra.mxu0 0.0
    %72 = vmatprep.subr.mxu0 0.0
    %73 = vmatpush1.msra.mxu0 0.0
    %74 = vmatprep.subr.mxu0 0.0
    %75 = vmatpush1.msra.mxu0 0.0
    %76 = vmatprep.subr.mxu0 0.0
    %77 = vmatpush1.msra.mxu0 0.0
    %78 = vmatprep.subr.mxu0 0.0
    %79 = vmatpush1.msra.mxu0 0.0
    %80 = vmatprep.subr.mxu0 0.0
    %81 = vmatpush1.msra.mxu0 0.0
    %82 = vmatprep.subr.mxu0 0.0
    %83 = vmatpush1.msra.mxu0 0.0
    %84 = vmatprep.subr.mxu0 0.0
    %85 = vmatpush1.msra.mxu0 0.0
    %86 = vmatprep.subr.mxu0 0.0
    %87 = vmatpush1.msra.mxu0 0.0
    %88 = vmatprep.subr.mxu0 0.0
    %89 = vmatpush1.msra.mxu0 0.0
    %90 = vmatprep.subr.mxu0 0.0
    %91 = vmatpush1.msra.mxu0 0.0
    %92 = vmatprep.subr.mxu0 0.0
    %93 = vmatpush1.msra.mxu0 0.0
    %94 = vmatprep.subr.mxu0 0.0
    %95 = vmatpush1.msra.mxu0 0.0
    %96 = vmatprep.subr.mxu0 0.0
    %97 = vmatpush1.msra.mxu0 0.0
    %98 = vmatprep.subr.mxu0 0.0
    %99 = vmatpush1.msra.mxu0 0.0
    %100 = vmatprep.subr.mxu0 0.0
    %101 = vmatpush1.msra.mxu0 0.0
    %102 = vmatprep.subr.mxu0 0.0
    %103 = vmatpush1.msra.mxu0 0.0
    %104 = vmatprep.subr.mxu0 0.0
    %105 = vmatpush1.msra.mxu0 0.0
    %106 = vmatprep.subr.mxu0 0.0
    %107 = vmatpush1.msra.mxu0 0.0
    %108 = vmatprep.subr.mxu0 0.0
    %109 = vmatpush1.msra.mxu0 0.0
    %110 = vmatprep.subr.mxu0 0.0
    %111 = vmatpush1.msra.mxu0 0.0
    %112 = vmatprep.subr.mxu0 0.0
    %113 = vmatpush1.msra.mxu0 0.0
    %114 = vmatprep.subr.mxu0 0.0
    %115 = vmatpush1.msra.mxu0 0.0
    %116 = vmatprep.subr.mxu0 0.0
    %117 = vmatpush1.msra.mxu0 0.0
    %118 = vmatprep.subr.mxu0 0.0
    %119 = vmatpush1.msra.mxu0 0.0
    %120 = vmatprep.mubr.f32.mxu0 0.0
    %121 = vmatmul.mubr.f32.gmra.mrb[0].mxu0 %v54
    %v122 = vpop.f32.mrb[0].mxu0
    %v123 = vadd.f32 %v45, %v122
    %v124 = vpop.f32.mrb[0].mxu0
    %v125 = vadd.f32 %v49, %v124
    %126 = vdwg.mxu0
    %v127 = vmax.f32 %v123, 0.0
    %v128 = vmax.f32 %v125, 0.0
    %v129 = vld [vmem:[%s3] sm:$0xff]
    %v130 = vld [vmem:[%s3 + $0x8] sm:$0xff]
    %v131 = vld [vmem:[%s3 + $0x10] sm:$0xff]
    %v132 = vld [vmem:[%s3 + $0x18] sm:$0xff]
    %v133 = vld [vmem:[%s3 + $0x20] sm:$0xff]
    %v134 = vld [vmem:[%s3 + $0x28] sm:$0xff]
    %v135 = vld [vmem:[%s3 + $0x30] sm:$0xff]
    %v136 = vld [vmem:[%s3 + $0x38] sm:$0xff]
    %v137 = vld [vmem:[%s3 + $0x40] sm:$0xff]
    %v138 = vld [vmem:[%s3 + $0x48] sm:$0xff]
    %v139 = vld [vmem:[%s3 + $0x50] sm:$0xff]
    %v140 = vld [vmem:[%s3 + $0x58] sm:$0xff]
    %v141 = vld [vmem:[%s3 + $0x60] sm:$0xff]
    %v142 = vld [vmem:[%s3 + $0x68] sm:$0xff]
    %v143 = vld [vmem:[%s3 + $0x70] sm:$0xff]
    %v144 = vld [vmem:[%s3 + $0x78] sm:$0xff]
    %v145 = vld [vmem:[%s3 + $0x80] sm:$0xff]
    %v146 = vld [vmem:[%s3 + $0x88] sm:$0xff]
    %v147 = vld [vmem:[%s3 + $0x90] sm:$0xff]
    %v148 = vld [vmem:[%s3 + $0x98] sm:$0xff]
    %v149 = vld [vmem:[%s3 + $0xa0] sm:$0xff]
    %v150 = vld [vmem:[%s3 + $0xa8] sm:$0xff]
    %v151 = vld [vmem:[%s3 + $0xb0] sm:$0xff]
    %v152 = vld [vmem:[%s3 + $0xb8] sm:$0xff]
    %v153 = vld [vmem:[%s3 + $0xc0] sm:$0xff]
    %v154 = vld [vmem:[%s3 + $0xc8] sm:$0xff]
    %v155 = vld [vmem:[%s3 + $0xd0] sm:$0xff]
    %v156 = vld [vmem:[%s3 + $0xd8] sm:$0xff]
    %v157 = vld [vmem:[%s3 + $0xe0] sm:$0xff]
    %v158 = vld [vmem:[%s3 + $0xe8] sm:$0xff]
    %v159 = vld [vmem:[%s3 + $0xf0] sm:$0xff]
    %v160 = vld [vmem:[%s3 + $0xf8] sm:$0xff]
    %v161 = vld [vmem:[%s4] sm:$0x1]
    %v163 = vlaneseq
    %v164 = vshrl.u32 %v163, 7
    %v165 = vsub.s32 0, %v164
    %v166 = vrot.slane %v161, %v165
    %168 = vmatprep.subr.mxu0 0.0
    %169 = vmatpush1.msra.mxu0 %v129
    %170 = vmatprep.subr.mxu0 0.0
    %171 = vmatpush1.msra.mxu0 %v130
    %172 = vmatprep.subr.mxu0 0.0
    %173 = vmatpush1.msra.mxu0 %v131
    %174 = vmatprep.subr.mxu0 0.0
    %175 = vmatpush1.msra.mxu0 %v132
    %176 = vmatprep.subr.mxu0 0.0
    %177 = vmatpush1.msra.mxu0 %v133
    %178 = vmatprep.subr.mxu0 0.0
    %179 = vmatpush1.msra.mxu0 %v134
    %180 = vmatprep.subr.mxu0 0.0
    %181 = vmatpush1.msra.mxu0 %v135
    %182 = vmatprep.subr.mxu0 0.0
    %183 = vmatpush1.msra.mxu0 %v136
    %184 = vmatprep.subr.mxu0 0.0
    %185 = vmatpush1.msra.mxu0 %v137
    %186 = vmatprep.subr.mxu0 0.0
    %187 = vmatpush1.msra.mxu0 %v138
    %188 = vmatprep.subr.mxu0 0.0
    %189 = vmatpush1.msra.mxu0 %v139
    %190 = vmatprep.subr.mxu0 0.0
    %191 = vmatpush1.msra.mxu0 %v140
    %192 = vmatprep.subr.mxu0 0.0
    %193 = vmatpush1.msra.mxu0 %v141
    %194 = vmatprep.subr.mxu0 0.0
    %195 = vmatpush1.msra.mxu0 %v142
    %196 = vmatprep.subr.mxu0 0.0
    %197 = vmatpush1.msra.mxu0 %v143
    %198 = vmatprep.subr.mxu0 0.0
    %199 = vmatpush1.msra.mxu0 %v144
    %200 = vmatprep.subr.mxu0 0.0
    %201 = vmatpush1.msra.mxu0 %v145
    %202 = vmatprep.subr.mxu0 0.0
    %203 = vmatpush1.msra.mxu0 %v146
    %204 = vmatprep.subr.mxu0 0.0
    %205 = vmatpush1.msra.mxu0 %v147
    %206 = vmatprep.subr.mxu0 0.0
    %207 = vmatpush1.msra.mxu0 %v148
    %208 = vmatprep.subr.mxu0 0.0
    %209 = vmatpush1.msra.mxu0 %v149
    %210 = vmatprep.subr.mxu0 0.0
    %211 = vmatpush1.msra.mxu0 %v150
    %212 = vmatprep.subr.mxu0 0.0
    %213 = vmatpush1.msra.mxu0 %v151
    %214 = vmatprep.subr.mxu0 0.0
    %215 = vmatpush1.msra.mxu0 %v152
    %216 = vmatprep.subr.mxu0 0.0
    %217 = vmatpush1.msra.mxu0 %v153
    %218 = vmatprep.subr.mxu0 0.0
    %219 = vmatpush1.msra.mxu0 %v154
    %220 = vmatprep.subr.mxu0 0.0
    %221 = vmatpush1.msra.mxu0 %v155
    %222 = vmatprep.subr.mxu0 0.0
    %223 = vmatpush1.msra.mxu0 %v156
    %224 = vmatprep.subr.mxu0 0.0
    %225 = vmatpush1.msra.mxu0 %v157
    %226 = vmatprep.subr.mxu0 0.0
    %227 = vmatpush1.msra.mxu0 %v158
    %228 = vmatprep.subr.mxu0 0.0
    %229 = vmatpush1.msra.mxu0 %v159
    %230 = vmatprep.subr.mxu0 0.0
    %231 = vmatpush1.msra.mxu0 %v160
    %232 = vmatprep.mubr.f32.mxu0 %v128
    %233 = vmatmul.mubr.f32.gmra.mrb[0].mxu0 %v127
    %v234 = vpop.f32.mrb[0].mxu0
    %v235 = vadd.f32 %v166, %v234
    %v236 = vpop.f32.mrb[0].mxu0
    %237 = vdwg.mxu0
    %v238 = vmax.f32 %v235, 0.0
    %v239 = vld [vmem:[%s5] sm:$0xff]
    %v240 = vld [vmem:[%s5 + $0x8] sm:$0xff]
    %v241 = vld [vmem:[%s5 + $0x10] sm:$0xff]
    %v242 = vld [vmem:[%s5 + $0x18] sm:$0xff]
    %v243 = vld [vmem:[%s5 + $0x20] sm:$0xff]
    %v244 = vld [vmem:[%s5 + $0x28] sm:$0xff]
    %v245 = vld [vmem:[%s5 + $0x30] sm:$0xff]
    %v246 = vld [vmem:[%s5 + $0x38] sm:$0xff]
    %v247 = vld [vmem:[%s5 + $0x40] sm:$0xff]
    %v248 = vld [vmem:[%s5 + $0x48] sm:$0xff]
    %v249 = vld [vmem:[%s5 + $0x50] sm:$0xff]
    %v250 = vld [vmem:[%s5 + $0x58] sm:$0xff]
    %v251 = vld [vmem:[%s5 + $0x60] sm:$0xff]
    %v252 = vld [vmem:[%s5 + $0x68] sm:$0xff]
    %v253 = vld [vmem:[%s5 + $0x70] sm:$0xff]
    %v254 = vld [vmem:[%s5 + $0x78] sm:$0xff]
    %v255 = vld [vmem:[%s5 + $0x80] sm:$0xff]
    %v256 = vld [vmem:[%s5 + $0x88] sm:$0xff]
    %v257 = vld [vmem:[%s5 + $0x90] sm:$0xff]
    %v258 = vld [vmem:[%s5 + $0x98] sm:$0xff]
    %v259 = vld [vmem:[%s5 + $0xa0] sm:$0xff]
    %v260 = vld [vmem:[%s5 + $0xa8] sm:$0xff]
    %v261 = vld [vmem:[%s5 + $0xb0] sm:$0xff]
    %v262 = vld [vmem:[%s5 + $0xb8] sm:$0xff]
    %v263 = vld [vmem:[%s5 + $0xc0] sm:$0xff]
    %v264 = vld [vmem:[%s5 + $0xc8] sm:$0xff]
    %v265 = vld [vmem:[%s5 + $0xd0] sm:$0xff]
    %v266 = vld [vmem:[%s5 + $0xd8] sm:$0xff]
    %v267 = vld [vmem:[%s5 + $0xe0] sm:$0xff]
    %v268 = vld [vmem:[%s5 + $0xe8] sm:$0xff]
    %v269 = vld [vmem:[%s5 + $0xf0] sm:$0xff]
    %v270 = vld [vmem:[%s5 + $0xf8] sm:$0xff]
    %v271 = vld [vmem:[%s5 + $0x100] sm:$0xff]
    %v272 = vld [vmem:[%s5 + $0x108] sm:$0xff]
    %v273 = vld [vmem:[%s5 + $0x110] sm:$0xff]
    %v274 = vld [vmem:[%s5 + $0x118] sm:$0xff]
    %v275 = vld [vmem:[%s5 + $0x120] sm:$0xff]
    %v276 = vld [vmem:[%s5 + $0x128] sm:$0xff]
    %v277 = vld [vmem:[%s5 + $0x130] sm:$0xff]
    %v278 = vld [vmem:[%s5 + $0x138] sm:$0xff]
    %v279 = vld [vmem:[%s5 + $0x140] sm:$0xff]
    %v280 = vld [vmem:[%s5 + $0x148] sm:$0xff]
    %v281 = vld [vmem:[%s5 + $0x150] sm:$0xff]
    %v282 = vld [vmem:[%s5 + $0x158] sm:$0xff]
    %v283 = vld [vmem:[%s5 + $0x160] sm:$0xff]
    %v284 = vld [vmem:[%s5 + $0x168] sm:$0xff]
    %v285 = vld [vmem:[%s5 + $0x170] sm:$0xff]
    %v286 = vld [vmem:[%s5 + $0x178] sm:$0xff]
    %v287 = vld [vmem:[%s5 + $0x180] sm:$0xff]
    %v288 = vld [vmem:[%s5 + $0x188] sm:$0xff]
    %v289 = vld [vmem:[%s5 + $0x190] sm:$0xff]
    %v290 = vld [vmem:[%s5 + $0x198] sm:$0xff]
    %v291 = vld [vmem:[%s5 + $0x1a0] sm:$0xff]
    %v292 = vld [vmem:[%s5 + $0x1a8] sm:$0xff]
    %v293 = vld [vmem:[%s5 + $0x1b0] sm:$0xff]
    %v294 = vld [vmem:[%s5 + $0x1b8] sm:$0xff]
    %v295 = vld [vmem:[%s5 + $0x1c0] sm:$0xff]
    %v296 = vld [vmem:[%s5 + $0x1c8] sm:$0xff]
    %v297 = vld [vmem:[%s5 + $0x1d0] sm:$0xff]
    %v298 = vld [vmem:[%s5 + $0x1d8] sm:$0xff]
    %v299 = vld [vmem:[%s5 + $0x1e0] sm:$0xff]
    %v300 = vld [vmem:[%s5 + $0x1e8] sm:$0xff]
    %v301 = vld [vmem:[%s5 + $0x1f0] sm:$0xff]
    %v302 = vld [vmem:[%s5 + $0x1f8] sm:$0xff]
    %v303 = vld [vmem:[%s5 + $0x200] sm:$0xff]
    %v304 = vld [vmem:[%s5 + $0x208] sm:$0xff]
    %v305 = vld [vmem:[%s5 + $0x210] sm:$0xff]
    %v306 = vld [vmem:[%s5 + $0x218] sm:$0xff]
    %v307 = vld [vmem:[%s5 + $0x220] sm:$0xff]
    %v308 = vld [vmem:[%s5 + $0x228] sm:$0xff]
    %v309 = vld [vmem:[%s5 + $0x230] sm:$0xff]
    %v310 = vld [vmem:[%s5 + $0x238] sm:$0xff]
    %v311 = vld [vmem:[%s5 + $0x240] sm:$0xff]
    %v312 = vld [vmem:[%s5 + $0x248] sm:$0xff]
    %v313 = vld [vmem:[%s5 + $0x250] sm:$0xff]
    %v314 = vld [vmem:[%s5 + $0x258] sm:$0xff]
    %v315 = vld [vmem:[%s5 + $0x260] sm:$0xff]
    %v316 = vld [vmem:[%s5 + $0x268] sm:$0xff]
    %v317 = vld [vmem:[%s5 + $0x270] sm:$0xff]
    %v318 = vld [vmem:[%s5 + $0x278] sm:$0xff]
    %v319 = vld [vmem:[%s5 + $0x280] sm:$0xff]
    %v320 = vld [vmem:[%s5 + $0x288] sm:$0xff]
    %v321 = vld [vmem:[%s5 + $0x290] sm:$0xff]
    %v322 = vld [vmem:[%s5 + $0x298] sm:$0xff]
    %v323 = vld [vmem:[%s5 + $0x2a0] sm:$0xff]
    %v324 = vld [vmem:[%s5 + $0x2a8] sm:$0xff]
    %v325 = vld [vmem:[%s5 + $0x2b0] sm:$0xff]
    %v326 = vld [vmem:[%s5 + $0x2b8] sm:$0xff]
    %v327 = vld [vmem:[%s5 + $0x2c0] sm:$0xff]
    %v328 = vld [vmem:[%s5 + $0x2c8] sm:$0xff]
    %v329 = vld [vmem:[%s5 + $0x2d0] sm:$0xff]
    %v330 = vld [vmem:[%s5 + $0x2d8] sm:$0xff]
    %v331 = vld [vmem:[%s5 + $0x2e0] sm:$0xff]
    %v332 = vld [vmem:[%s5 + $0x2e8] sm:$0xff]
    %v333 = vld [vmem:[%s5 + $0x2f0] sm:$0xff]
    %v334 = vld [vmem:[%s5 + $0x2f8] sm:$0xff]
    %v335 = vld [vmem:[%s5 + $0x300] sm:$0xff]
    %v336 = vld [vmem:[%s5 + $0x308] sm:$0xff]
    %v337 = vld [vmem:[%s5 + $0x310] sm:$0xff]
    %v338 = vld [vmem:[%s5 + $0x318] sm:$0xff]
    %v339 = vld [vmem:[%s5 + $0x320] sm:$0xff]
    %v340 = vld [vmem:[%s5 + $0x328] sm:$0xff]
    %v341 = vld [vmem:[%s5 + $0x330] sm:$0xff]
    %v342 = vld [vmem:[%s5 + $0x338] sm:$0xff]
    %v343 = vld [vmem:[%s5 + $0x340] sm:$0xff]
    %v344 = vld [vmem:[%s5 + $0x348] sm:$0xff]
    %v345 = vld [vmem:[%s5 + $0x350] sm:$0xff]
    %v346 = vld [vmem:[%s5 + $0x358] sm:$0xff]
    %v347 = vld [vmem:[%s5 + $0x360] sm:$0xff]
    %v348 = vld [vmem:[%s5 + $0x368] sm:$0xff]
    %v349 = vld [vmem:[%s5 + $0x370] sm:$0xff]
    %v350 = vld [vmem:[%s5 + $0x378] sm:$0xff]
    %v351 = vld [vmem:[%s6] sm:$0x7f]
    %v353 = vlaneseq
    %v354 = vshrl.u32 %v353, 7
    %v355 = vsub.s32 0, %v354
    %v356 = vrot.slane %v351, %v355
    %v357 = vlaneseq
    %v358 = vshrl.u32 %v357, 7
    %v359 = vsub.s32 1, %v358
    %v360 = vrot.slane %v351, %v359
    %v361 = vlaneseq
    %v362 = vshrl.u32 %v361, 7
    %v363 = vsub.s32 2, %v362
    %v364 = vrot.slane %v351, %v363
    %v365 = vlaneseq
    %v366 = vshrl.u32 %v365, 7
    %v367 = vsub.s32 3, %v366
    %v368 = vrot.slane %v351, %v367
    %v369 = vlaneseq
    %v370 = vshrl.u32 %v369, 7
    %v371 = vsub.s32 4, %v370
    %v372 = vrot.slane %v351, %v371
    %v373 = vlaneseq
    %v374 = vshrl.u32 %v373, 7
    %v375 = vsub.s32 5, %v374
    %v376 = vrot.slane %v351, %v375
    %v377 = vlaneseq
    %v378 = vshrl.u32 %v377, 7
    %v379 = vsub.s32 6, %v378
    %v380 = vrot.slane %v351, %v379
    %388 = vmatprep.subr.mxu0 %v240
    %389 = vmatpush1.msra.mxu0 %v239
    %390 = vmatprep.subr.mxu0 %v247
    %391 = vmatpush1.msra.mxu0 %v246
    %392 = vmatprep.subr.mxu0 %v254
    %393 = vmatpush1.msra.mxu0 %v253
    %394 = vmatprep.subr.mxu0 %v261
    %395 = vmatpush1.msra.mxu0 %v260
    %396 = vmatprep.subr.mxu0 %v268
    %397 = vmatpush1.msra.mxu0 %v267
    %398 = vmatprep.subr.mxu0 %v275
    %399 = vmatpush1.msra.mxu0 %v274
    %400 = vmatprep.subr.mxu0 %v282
    %401 = vmatpush1.msra.mxu0 %v281
    %402 = vmatprep.subr.mxu0 %v289
    %403 = vmatpush1.msra.mxu0 %v288
    %404 = vmatprep.subr.mxu0 %v296
    %405 = vmatpush1.msra.mxu0 %v295
    %406 = vmatprep.subr.mxu0 %v303
    %407 = vmatpush1.msra.mxu0 %v302
    %408 = vmatprep.subr.mxu0 %v310
    %409 = vmatpush1.msra.mxu0 %v309
    %410 = vmatprep.subr.mxu0 %v317
    %411 = vmatpush1.msra.mxu0 %v316
    %412 = vmatprep.subr.mxu0 %v324
    %413 = vmatpush1.msra.mxu0 %v323
    %414 = vmatprep.subr.mxu0 %v331
    %415 = vmatpush1.msra.mxu0 %v330
    %416 = vmatprep.subr.mxu0 %v338
    %417 = vmatpush1.msra.mxu0 %v337
    %418 = vmatprep.subr.mxu0 %v345
    %419 = vmatpush1.msra.mxu0 %v344
    %420 = vmatprep.subr.mxu0 0.0
    %421 = vmatpush1.msra.mxu0 0.0
    %422 = vmatprep.subr.mxu0 0.0
    %423 = vmatpush1.msra.mxu0 0.0
    %424 = vmatprep.subr.mxu0 0.0
    %425 = vmatpush1.msra.mxu0 0.0
    %426 = vmatprep.subr.mxu0 0.0
    %427 = vmatpush1.msra.mxu0 0.0
    %428 = vmatprep.subr.mxu0 0.0
    %429 = vmatpush1.msra.mxu0 0.0
    %430 = vmatprep.subr.mxu0 0.0
    %431 = vmatpush1.msra.mxu0 0.0
    %432 = vmatprep.subr.mxu0 0.0
    %433 = vmatpush1.msra.mxu0 0.0
    %434 = vmatprep.subr.mxu0 0.0
    %435 = vmatpush1.msra.mxu0 0.0
    %436 = vmatprep.subr.mxu0 0.0
    %437 = vmatpush1.msra.mxu0 0.0
    %438 = vmatprep.subr.mxu0 0.0
    %439 = vmatpush1.msra.mxu0 0.0
    %440 = vmatprep.subr.mxu0 0.0
    %441 = vmatpush1.msra.mxu0 0.0
    %442 = vmatprep.subr.mxu0 0.0
    %443 = vmatpush1.msra.mxu0 0.0
    %444 = vmatprep.subr.mxu0 0.0
    %445 = vmatpush1.msra.mxu0 0.0
    %446 = vmatprep.subr.mxu0 0.0
    %447 = vmatpush1.msra.mxu0 0.0
    %448 = vmatprep.subr.mxu0 0.0
    %449 = vmatpush1.msra.mxu0 0.0
    %450 = vmatprep.subr.mxu0 0.0
    %451 = vmatpush1.msra.mxu0 0.0
    %452 = vmatprep.mubr.f32.mxu0 0.0
    %453 = vmatmul.mubr.f32.gmra.mrb[0].mxu0 %v238
    %v454 = vpop.f32.mrb[0].mxu0
    %v455 = vadd.f32 %v356, %v454
    %v456 = vpop.f32.mrb[0].mxu0
    %v457 = vadd.f32 %v360, %v456
    %458 = vdwg.mxu0
    %459 = vmatprep.subr.mxu0 %v242
    %460 = vmatpush1.msra.mxu0 %v241
    %461 = vmatprep.subr.mxu0 %v249
    %462 = vmatpush1.msra.mxu0 %v248
    %463 = vmatprep.subr.mxu0 %v256
    %464 = vmatpush1.msra.mxu0 %v255
    %465 = vmatprep.subr.mxu0 %v263
    %466 = vmatpush1.msra.mxu0 %v262
    %467 = vmatprep.subr.mxu0 %v270
    %468 = vmatpush1.msra.mxu0 %v269
    %469 = vmatprep.subr.mxu0 %v277
    %470 = vmatpush1.msra.mxu0 %v276
    %471 = vmatprep.subr.mxu0 %v284
    %472 = vmatpush1.msra.mxu0 %v283
    %473 = vmatprep.subr.mxu0 %v291
    %474 = vmatpush1.msra.mxu0 %v290
    %475 = vmatprep.subr.mxu0 %v298
    %476 = vmatpush1.msra.mxu0 %v297
    %477 = vmatprep.subr.mxu0 %v305
    %478 = vmatpush1.msra.mxu0 %v304
    %479 = vmatprep.subr.mxu0 %v312
    %480 = vmatpush1.msra.mxu0 %v311
    %481 = vmatprep.subr.mxu0 %v319
    %482 = vmatpush1.msra.mxu0 %v318
    %483 = vmatprep.subr.mxu0 %v326
    %484 = vmatpush1.msra.mxu0 %v325
    %485 = vmatprep.subr.mxu0 %v333
    %486 = vmatpush1.msra.mxu0 %v332
    %487 = vmatprep.subr.mxu0 %v340
    %488 = vmatpush1.msra.mxu0 %v339
    %489 = vmatprep.subr.mxu0 %v347
    %490 = vmatpush1.msra.mxu0 %v346
    %491 = vmatprep.subr.mxu0 0.0
    %492 = vmatpush1.msra.mxu0 0.0
    %493 = vmatprep.subr.mxu0 0.0
    %494 = vmatpush1.msra.mxu0 0.0
    %495 = vmatprep.subr.mxu0 0.0
    %496 = vmatpush1.msra.mxu0 0.0
    %497 = vmatprep.subr.mxu0 0.0
    %498 = vmatpush1.msra.mxu0 0.0
    %499 = vmatprep.subr.mxu0 0.0
    %500 = vmatpush1.msra.mxu0 0.0
    %501 = vmatprep.subr.mxu0 0.0
    %502 = vmatpush1.msra.mxu0 0.0
    %503 = vmatprep.subr.mxu0 0.0
    %504 = vmatpush1.msra.mxu0 0.0
    %505 = vmatprep.subr.mxu0 0.0
    %506 = vmatpush1.msra.mxu0 0.0
    %507 = vmatprep.subr.mxu0 0.0
    %508 = vmatpush1.msra.mxu0 0.0
    %509 = vmatprep.subr.mxu0 0.0
    %510 = vmatpush1.msra.mxu0 0.0
    %511 = vmatprep.subr.mxu0 0.0
    %512 = vmatpush1.msra.mxu0 0.0
    %513 = vmatprep.subr.mxu0 0.0
    %514 = vmatpush1.msra.mxu0 0.0
    %515 = vmatprep.subr.mxu0 0.0
    %516 = vmatpush1.msra.mxu0 0.0
    %517 = vmatprep.subr.mxu0 0.0
    %518 = vmatpush1.msra.mxu0 0.0
    %519 = vmatprep.subr.mxu0 0.0
    %520 = vmatpush1.msra.mxu0 0.0
    %521 = vmatprep.subr.mxu0 0.0
    %522 = vmatpush1.msra.mxu0 0.0
    %523 = vmatprep.mubr.f32.mxu0 0.0
    %524 = vmatmul.mubr.f32.gmra.mrb[0].mxu0 %v238
    %v525 = vpop.f32.mrb[0].mxu0
    %v526 = vadd.f32 %v364, %v525
    %v527 = vpop.f32.mrb[0].mxu0
    %v528 = vadd.f32 %v368, %v527
    %529 = vdwg.mxu0
    %530 = vmatprep.subr.mxu0 %v244
    %531 = vmatpush1.msra.mxu0 %v243
    %532 = vmatprep.subr.mxu0 %v251
    %533 = vmatpush1.msra.mxu0 %v250
    %534 = vmatprep.subr.mxu0 %v258
    %535 = vmatpush1.msra.mxu0 %v257
    %536 = vmatprep.subr.mxu0 %v265
    %537 = vmatpush1.msra.mxu0 %v264
    %538 = vmatprep.subr.mxu0 %v272
    %539 = vmatpush1.msra.mxu0 %v271
    %540 = vmatprep.subr.mxu0 %v279
    %541 = vmatpush1.msra.mxu0 %v278
    %542 = vmatprep.subr.mxu0 %v286
    %543 = vmatpush1.msra.mxu0 %v285
    %544 = vmatprep.subr.mxu0 %v293
    %545 = vmatpush1.msra.mxu0 %v292
    %546 = vmatprep.subr.mxu0 %v300
    %547 = vmatpush1.msra.mxu0 %v299
    %548 = vmatprep.subr.mxu0 %v307
    %549 = vmatpush1.msra.mxu0 %v306
    %550 = vmatprep.subr.mxu0 %v314
    %551 = vmatpush1.msra.mxu0 %v313
    %552 = vmatprep.subr.mxu0 %v321
    %553 = vmatpush1.msra.mxu0 %v320
    %554 = vmatprep.subr.mxu0 %v328
    %555 = vmatpush1.msra.mxu0 %v327
    %556 = vmatprep.subr.mxu0 %v335
    %557 = vmatpush1.msra.mxu0 %v334
    %558 = vmatprep.subr.mxu0 %v342
    %559 = vmatpush1.msra.mxu0 %v341
    %560 = vmatprep.subr.mxu0 %v349
    %561 = vmatpush1.msra.mxu0 %v348
    %562 = vmatprep.subr.mxu0 0.0
    %563 = vmatpush1.msra.mxu0 0.0
    %564 = vmatprep.subr.mxu0 0.0
    %565 = vmatpush1.msra.mxu0 0.0
    %566 = vmatprep.subr.mxu0 0.0
    %567 = vmatpush1.msra.mxu0 0.0
    %568 = vmatprep.subr.mxu0 0.0
    %569 = vmatpush1.msra.mxu0 0.0
    %570 = vmatprep.subr.mxu0 0.0
    %571 = vmatpush1.msra.mxu0 0.0
    %572 = vmatprep.subr.mxu0 0.0
    %573 = vmatpush1.msra.mxu0 0.0
    %574 = vmatprep.subr.mxu0 0.0
    %575 = vmatpush1.msra.mxu0 0.0
    %576 = vmatprep.subr.mxu0 0.0
    %577 = vmatpush1.msra.mxu0 0.0
    %578 = vmatprep.subr.mxu0 0.0
    %579 = vmatpush1.msra.mxu0 0.0
    %580 = vmatprep.subr.mxu0 0.0
    %581 = vmatpush1.msra.mxu0 0.0
    %582 = vmatprep.subr.mxu0 0.0
    %583 = vmatpush1.msra.mxu0 0.0
    %584 = vmatprep.subr.mxu0 0.0
    %585 = vmatpush1.msra.mxu0 0.0
    %586 = vmatprep.subr.mxu0 0.0
    %587 = vmatpush1.msra.mxu0 0.0
    %588 = vmatprep.subr.mxu0 0.0
    %589 = vmatpush1.msra.mxu0 0.0
    %590 = vmatprep.subr.mxu0 0.0
    %591 = vmatpush1.msra.mxu0 0.0
    %592 = vmatprep.subr.mxu0 0.0
    %593 = vmatpush1.msra.mxu0 0.0
    %594 = vmatprep.mubr.f32.mxu0 0.0
    %595 = vmatmul.mubr.f32.gmra.mrb[0].mxu0 %v238
    %v596 = vpop.f32.mrb[0].mxu0
    %v597 = vadd.f32 %v372, %v596
    %v598 = vpop.f32.mrb[0].mxu0
    %v599 = vadd.f32 %v376, %v598
    %600 = vdwg.mxu0
    %601 = vmatprep.subr.mxu0 0.0
    %602 = vmatpush1.msra.mxu0 %v245
    %603 = vmatprep.subr.mxu0 0.0
    %604 = vmatpush1.msra.mxu0 %v252
    %605 = vmatprep.subr.mxu0 0.0
    %606 = vmatpush1.msra.mxu0 %v259
    %607 = vmatprep.subr.mxu0 0.0
    %608 = vmatpush1.msra.mxu0 %v266
    %609 = vmatprep.subr.mxu0 0.0
    %610 = vmatpush1.msra.mxu0 %v273
    %611 = vmatprep.subr.mxu0 0.0
    %612 = vmatpush1.msra.mxu0 %v280
    %613 = vmatprep.subr.mxu0 0.0
    %614 = vmatpush1.msra.mxu0 %v287
    %615 = vmatprep.subr.mxu0 0.0
    %616 = vmatpush1.msra.mxu0 %v294
    %617 = vmatprep.subr.mxu0 0.0
    %618 = vmatpush1.msra.mxu0 %v301
    %619 = vmatprep.subr.mxu0 0.0
    %620 = vmatpush1.msra.mxu0 %v308
    %621 = vmatprep.subr.mxu0 0.0
    %622 = vmatpush1.msra.mxu0 %v315
    %623 = vmatprep.subr.mxu0 0.0
    %624 = vmatpush1.msra.mxu0 %v322
    %625 = vmatprep.subr.mxu0 0.0
    %626 = vmatpush1.msra.mxu0 %v329
    %627 = vmatprep.subr.mxu0 0.0
    %628 = vmatpush1.msra.mxu0 %v336
    %629 = vmatprep.subr.mxu0 0.0
    %630 = vmatpush1.msra.mxu0 %v343
    %631 = vmatprep.subr.mxu0 0.0
    %632 = vmatpush1.msra.mxu0 %v350
    %633 = vmatprep.subr.mxu0 0.0
    %634 = vmatpush1.msra.mxu0 0.0
    %635 = vmatprep.subr.mxu0 0.0
    %636 = vmatpush1.msra.mxu0 0.0
    %637 = vmatprep.subr.mxu0 0.0
    %638 = vmatpush1.msra.mxu0 0.0
    %639 = vmatprep.subr.mxu0 0.0
    %640 = vmatpush1.msra.mxu0 0.0
    %641 = vmatprep.subr.mxu0 0.0
    %642 = vmatpush1.msra.mxu0 0.0
    %643 = vmatprep.subr.mxu0 0.0
    %644 = vmatpush1.msra.mxu0 0.0
    %645 = vmatprep.subr.mxu0 0.0
    %646 = vmatpush1.msra.mxu0 0.0
    %647 = vmatprep.subr.mxu0 0.0
    %648 = vmatpush1.msra.mxu0 0.0
    %649 = vmatprep.subr.mxu0 0.0
    %650 = vmatpush1.msra.mxu0 0.0
    %651 = vmatprep.subr.mxu0 0.0
    %652 = vmatpush1.msra.mxu0 0.0
    %653 = vmatprep.subr.mxu0 0.0
    %654 = vmatpush1.msra.mxu0 0.0
    %655 = vmatprep.subr.mxu0 0.0
    %656 = vmatpush1.msra.mxu0 0.0
    %657 = vmatprep.subr.mxu0 0.0
    %658 = vmatpush1.msra.mxu0 0.0
    %659 = vmatprep.subr.mxu0 0.0
    %660 = vmatpush1.msra.mxu0 0.0
    %661 = vmatprep.subr.mxu0 0.0
    %662 = vmatpush1.msra.mxu0 0.0
    %663 = vmatprep.subr.mxu0 0.0
    %664 = vmatpush1.msra.mxu0 0.0
    %665 = vmatprep.mubr.f32.mxu0 0.0
    %666 = vmatmul.mubr.f32.gmra.mrb[0].mxu0 %v238
    %v667 = vpop.f32.mrb[0].mxu0
    %v668 = vadd.f32 %v380, %v667
    %v669 = vpop.f32.mrb[0].mxu0
    %670 = vdwg.mxu0
    %v671 = vtanh.pop %v455
    %v672 = vtanh.pop %v457
    %v673 = vtanh.pop %v526
    %v674 = vtanh.pop %v528
    %v675 = vtanh.pop %v597
    %v676 = vtanh.pop %v599
    %v677 = vtanh.pop %v668
    %678 = vst [vmem:[#allocation2] sm:$0xff] %v671
    %679 = vst [vmem:[#allocation2 + $0x8] sm:$0xff] %v672
    %680 = vst [vmem:[#allocation2 + $0x10] sm:$0xff] %v673
    %681 = vst [vmem:[#allocation2 + $0x18] sm:$0xff] %v674
    %682 = vst [vmem:[#allocation2 + $0x20] sm:$0xff] %v675
    %683 = vst [vmem:[#allocation2 + $0x28] sm:$0xff] %v676
    %vm684 = vcmask 130048
    %685 = vst.msk [vmem:[#allocation2 + $0x30] sm:$0xff] %vm684, %v677
    // Predicated region
    $region30: #{tpu_custom_call.1} parent=1 // pred_check
      _
    $region31: #{tpu_custom_call.1} parent=1 // pred_check_branch
      %687 = sbr.rel (0) target = $region33
    $region32: #{tpu_custom_call.1} parent=1 // pred_region
      %s689 = ssub.s32 896, 896
      %690 = vsyncadd [#allocation3], %s689
      %s692 = sshll.u32 [#allocation2], 4
      %s693 = int_to_ptr.vmem [resolvable:$true] %s692
      %695 = dma.vmem_to_hbm [thread:$0]  %s693, 896, %s7, [#allocation3]
    $region33: #{tpu_custom_call.1} parent=1 // pred_fallthru
      _
    // Predicated region
    $region34: #{tpu_custom_call.1} parent=1 // pred_check
      _
    $region35: #{tpu_custom_call.1} parent=1 // pred_check_branch
      %697 = sbr.rel (0) target = $region37
    $region36: #{tpu_custom_call.1} parent=1 // pred_region
      %698 = dma.done [#allocation3], 896
    $region37: #{tpu_custom_call.1} parent=1 // pred_fallthru
      _
    %699 = vsyncpa [#allocation3], 1

</llo_original>
